<compile_context>
chip_gen: v6e
topology: v6e:2x2x1
jax: 0.10.0
libtpu: 0.0.40
codegen_flags: <defaults>
</compile_context>

<pallas_src>
import math

import jax
import jax.numpy as jnp
from jax.experimental import pallas as pl
from jax.experimental.pallas import tpu as pltpu

# ----------------------- model hyperparameters (small) -----------------------
BATCH = 2
SEQ = 8
NUM_HIDDENS = 32          # key_size = query_size = value_size = num_hiddens
NUM_HEADS = 4
FFN_HIDDENS = 64
LN_EPS = 1e-5
USE_BIAS = False          # attention projections have no bias (use_bias=False)
# TODO(synk): nn.Dropout is identity in inference mode; training-mode dropout not implemented.


def _layernorm(x, gamma, beta):
    # PyTorch nn.LayerNorm over the last dim, biased variance, eps=1e-5 (f32)
    mu = jnp.mean(x, axis=-1, keepdims=True)
    var = jnp.mean((x - mu) * (x - mu), axis=-1, keepdims=True)
    return (x - mu) * jax.lax.rsqrt(var + LN_EPS) * gamma + beta


def encoder_block_kernel(x_ref,       # (T, H) f32
                         kv_ref,      # (1, T) f32  runtime key-valid mask {0,1}
                         wslab_ref,   # (5H+F, max(H,F)) bf16 packed weights
                         consts_ref,  # (2R, H) f32: head mask rows 0:R, batch bias rows R:2R (lanes 0:T)
                         vecs_ref,    # (6, max(H,F)) f32: g1, be1, b1, b2, g2, be2
                         o_ref):      # (T, H) f32
    T, H = x_ref.shape
    F = FFN_HIDDENS
    nh = NUM_HEADS
    R = nh * T

    x = x_ref[...]                                   # (T, H) f32
    x_bf = x.astype(jnp.bfloat16)

    # ---- static, aligned slices of the packed weight slab (one DMA for all) ----
    wq = wslab_ref[0:H, 0:H]                         # 1/sqrt(d) already folded in
    wk = wslab_ref[H:2 * H, 0:H]
    wv = wslab_ref[2 * H:3 * H, 0:H]
    wo = wslab_ref[3 * H:4 * H, 0:H]
    w1 = wslab_ref[4 * H:5 * H, 0:F]                 # (H, F)
    w2 = wslab_ref[5 * H:5 * H + F, 0:H]             # (F, H)

    head_mask = consts_ref[0:R, 0:H]                 # (R, H) f32 {0,1}
    batch_bias = consts_ref[R:2 * R, 0:T]            # (R, T) f32 {0,-1e30}

    # ---- Q/K/V projections: three lane-aligned MXU pushes (MXU far from full) ----
    q = jnp.dot(x_bf, wq, preferred_element_type=jnp.float32)               # (T, H) f32
    k = jnp.dot(x_bf, wk, preferred_element_type=jnp.float32).astype(jnp.bfloat16)
    v = jnp.dot(x_bf, wv, preferred_element_type=jnp.float32).astype(jnp.bfloat16)

    # ---- heads on sublanes: tile q, zero out columns not owned by the row's head ----
    q_bd = (jnp.concatenate([q] * nh, axis=0) * head_mask).astype(jnp.bfloat16)  # (R, H)

    # scores[h*T + t, u] = <q_h(t), k_h(u)> for every head in one MXU push.
    scores = jax.lax.dot_general(
        q_bd, k, dimension_numbers=(((1,), (1,)), ((), ())),
        preferred_element_type=jnp.float32)          # (R, T)

    # d2l masked softmax: invalid keys -> -1e6 (runtime, one broadcast compare),
    # cross-batch keys -> -1e30 additive bias (precomputed, static).
    kvalid = kv_ref[...]                             # (1, T) f32
    scores = jnp.where(kvalid != 0.0, scores, -1e6) + batch_bias

    m = jnp.max(scores, axis=-1, keepdims=True)
    e = jnp.exp(scores - m)
    p = e * pl.reciprocal(jnp.sum(e, axis=-1, keepdims=True), approx=True)

    # ---- attention values; sum head blocks BEFORE the Wo projection ----
    o_all = jnp.dot(p.astype(jnp.bfloat16), v,
                    preferred_element_type=jnp.float32)        # (R, H)
    o_all = o_all * head_mask                                   # keep only own-head cols
    attn = o_all[0:T]
    for h in range(1, nh):                                      # aligned sublane blocks
        attn = attn + o_all[h * T:(h + 1) * T]                  # (T, H)
    attn = jnp.dot(attn.astype(jnp.bfloat16), wo,
                   preferred_element_type=jnp.float32)          # (T, H): 4x smaller than (R, H)

    # ---- packed small f32 vectors ----
    g1 = vecs_ref[0:1, 0:H]
    be1 = vecs_ref[1:2, 0:H]
    b1 = vecs_ref[2:3, 0:F]
    b2 = vecs_ref[3:4, 0:H]
    g2 = vecs_ref[4:5, 0:H]
    be2 = vecs_ref[5:6, 0:H]

    # ---- AddNorm 1 ----
    y = _layernorm(attn + x, g1, be1)

    # ---- PositionWiseFFN ----
    h1 = jnp.maximum(
        jnp.dot(y.astype(jnp.bfloat16), w1, preferred_element_type=jnp.float32) + b1, 0.0)
    ffn = jnp.dot(h1.astype(jnp.bfloat16), w2, preferred_element_type=jnp.float32) + b2

    # ---- AddNorm 2 ----
    o_ref[...] = _layernorm(ffn + y, g2, be2)


def pack_params(params):
    """One-time host-side parameter transform:
       * fold 1/sqrt(d) into Wq, cast all matmul weights to bf16 and pack them
         into one slab (one DMA),
       * pack the six small f32 vectors into one tile,
       * precompute the fully static head-block mask and cross-batch additive
         bias (they depend only on B, S, H, nh)."""
    H = params["wq"].shape[0]
    F = params["w1"].shape[1]
    W = max(H, F)
    d = H // NUM_HEADS
    scale = 1.0 / math.sqrt(d)
    T = BATCH * SEQ
    R = NUM_HEADS * T

    def padc(w, width):
        return jnp.pad(w, ((0, 0), (0, width - w.shape[1])))

    wslab = jnp.concatenate([
        padc(params["wq"] * scale, W), padc(params["wk"], W),
        padc(params["wv"], W), padc(params["wo"], W),
        padc(params["w1"], W), padc(params["w2"], W)], axis=0).astype(jnp.bfloat16)

    # head mask: row block h (rows h*T:(h+1)*T) owns feature columns h*d:(h+1)*d
    row = jnp.arange(R)[:, None]
    head_mask = ((row // T) == (jnp.arange(H)[None, :] // d)).astype(jnp.float32)   # (R, H)
    # cross-batch bias: query row r belongs to batch (r % T) // S, key column u to batch u // S
    qb = (row % T) // SEQ
    kb = jnp.arange(T)[None, :] // SEQ
    batch_bias = jnp.where(qb == kb, 0.0, -1e30).astype(jnp.float32)                 # (R, T)
    consts = jnp.concatenate([head_mask, padc(batch_bias, H)], axis=0)               # (2R, H)

    vecs = jnp.concatenate([
        padc(params["g1"], W), padc(params["be1"], W), padc(params["b1"], W),
        padc(params["b2"], W), padc(params["g2"], W), padc(params["be2"], W)],
        axis=0)                                                                       # (6, W)

    return {"wslab": wslab, "consts": consts, "vecs": vecs}


def encoder_block(x, valid_lens, packed):
    B, S, H = x.shape
    T = B * S
    x2 = x.reshape(T, H)                             # flatten batch into sublanes
    # per-key validity row: key index t -> batch t//S, position t%S
    kv_row = (jnp.arange(S, dtype=jnp.int32)[None, :]
              < valid_lens.astype(jnp.int32)[:, None]).astype(jnp.float32).reshape(1, T)

    vmem = pl.BlockSpec(memory_space=pltpu.MemorySpace.VMEM)

    out = pl.pallas_call(
        encoder_block_kernel,
        out_shape=jax.ShapeDtypeStruct((T, H), jnp.float32),
        in_specs=[vmem] * 5,
        out_specs=vmem,
    )(x2, kv_row, packed["wslab"], packed["consts"], packed["vecs"])
    return out.reshape(B, S, H)


# ----------------------------- pure JAX reference -----------------------------
def encoder_block_ref(x, valid_lens, params):
    B, S, H = x.shape
    d = H // NUM_HEADS
    q = x @ params["wq"]
    k = x @ params["wk"]
    v = x @ params["wv"]

    def heads(t):  # (B,S,H) -> (B,nh,S,d)
        return t.reshape(B, S, NUM_HEADS, d).transpose(0, 2, 1, 3)

    qh, kh, vh = heads(q), heads(k), heads(v)
    s = jnp.einsum("bhqd,bhkd->bhqk", qh, kh) / math.sqrt(d)
    col = jnp.arange(S)[None, None, None, :]
    mask = col < valid_lens[:, None, None, None]
    s = jnp.where(mask, s, -1e6)
    p = jax.nn.softmax(s, axis=-1)
    o = jnp.einsum("bhqk,bhkd->bhqd", p, vh).transpose(0, 2, 1, 3).reshape(B, S, H)
    attn = o @ params["wo"]

    def ln(z, g, b):
        mu = jnp.mean(z, axis=-1, keepdims=True)
        var = jnp.mean((z - mu) ** 2, axis=-1, keepdims=True)
        return (z - mu) * jax.lax.rsqrt(var + LN_EPS) * g + b

    y = ln(attn + x, params["g1"], params["be1"])
    ffn = jnp.maximum(y @ params["w1"] + params["b1"], 0.0) @ params["w2"] + params["b2"]
    return ln(ffn + y, params["g2"], params["be2"])


if __name__ == "__main__":
    key = jax.random.PRNGKey(0)
    ks = jax.random.split(key, 10)

    H, F = NUM_HIDDENS, FFN_HIDDENS
    scale = 0.1
    params = {
        "wq": scale * jax.random.normal(ks[0], (H, H), jnp.float32),
        "wk": scale * jax.random.normal(ks[1], (H, H), jnp.float32),
        "wv": scale * jax.random.normal(ks[2], (H, H), jnp.float32),
        "wo": scale * jax.random.normal(ks[3], (H, H), jnp.float32),
        "g1": jnp.ones((1, H), jnp.float32),
        "be1": jnp.zeros((1, H), jnp.float32),
        "w1": scale * jax.random.normal(ks[4], (H, F), jnp.float32),
        "b1": scale * jax.random.normal(ks[5], (1, F), jnp.float32),
        "w2": scale * jax.random.normal(ks[6], (F, H), jnp.float32),
        "b2": scale * jax.random.normal(ks[7], (1, H), jnp.float32),
        "g2": jnp.ones((1, H), jnp.float32),
        "be2": jnp.zeros((1, H), jnp.float32),
    }
    packed = pack_params(params)

    x = jax.random.normal(ks[8], (BATCH, SEQ, H), jnp.float32)
    valid_lens = jnp.array([5, 8], dtype=jnp.int32)

    out = jax.block_until_ready(encoder_block(x, valid_lens, packed))
    ref = encoder_block_ref(x, valid_lens, params)

    assert out.shape == (BATCH, SEQ, H)
    # bf16 MXU operands -> tolerance relaxed vs. the pure-f32 reference.
    assert jnp.allclose(out, ref, atol=3e-2, rtol=3e-2), (
        f"max abs diff {jnp.max(jnp.abs(out - ref))}")
    print("KERNEL_OK")
</pallas_src>

<mosaic_0001>
module attributes {stable_mosaic.version = 11 : i64} {
  func.func @encoder_block_kernel(%arg0: memref<16x32xf32, #tpu.memory_space<vmem>>, %arg1: memref<1x16xf32, #tpu.memory_space<vmem>>, %arg2: memref<224x64xbf16, #tpu.memory_space<vmem>>, %arg3: memref<128x32xf32, #tpu.memory_space<vmem>>, %arg4: memref<6x64xf32, #tpu.memory_space<vmem>>, %arg5: memref<16x32xf32, #tpu.memory_space<vmem>>) attributes {dimension_semantics = [], scalar_prefetch = 0 : i64, scratch_operands = 0 : i64, tpu.core_type = #tpu.core_type<tc>} {
    %c0 = arith.constant 0 : index
    %c0_0 = arith.constant 0 : index
    %0 = vector.load %arg0[%c0, %c0_0] : memref<16x32xf32, #tpu.memory_space<vmem>>, vector<16x32xf32>
    %1 = arith.truncf %0 : vector<16x32xf32> to vector<16x32xbf16>
    %c0_1 = arith.constant 0 : index
    %c0_2 = arith.constant 0 : index
    %2 = vector.load %arg2[%c0_1, %c0_2] : memref<224x64xbf16, #tpu.memory_space<vmem>>, vector<32x32xbf16>
    %c32 = arith.constant 32 : index
    %c0_3 = arith.constant 0 : index
    %3 = vector.load %arg2[%c32, %c0_3] : memref<224x64xbf16, #tpu.memory_space<vmem>>, vector<32x32xbf16>
    %c64 = arith.constant 64 : index
    %c0_4 = arith.constant 0 : index
    %4 = vector.load %arg2[%c64, %c0_4] : memref<224x64xbf16, #tpu.memory_space<vmem>>, vector<32x32xbf16>
    %c96 = arith.constant 96 : index
    %c0_5 = arith.constant 0 : index
    %5 = vector.load %arg2[%c96, %c0_5] : memref<224x64xbf16, #tpu.memory_space<vmem>>, vector<32x32xbf16>
    %c128 = arith.constant 128 : index
    %c0_6 = arith.constant 0 : index
    %6 = vector.load %arg2[%c128, %c0_6] : memref<224x64xbf16, #tpu.memory_space<vmem>>, vector<32x64xbf16>
    %c160 = arith.constant 160 : index
    %c0_7 = arith.constant 0 : index
    %7 = vector.load %arg2[%c160, %c0_7] : memref<224x64xbf16, #tpu.memory_space<vmem>>, vector<64x32xbf16>
    %c0_8 = arith.constant 0 : index
    %c0_9 = arith.constant 0 : index
    %8 = vector.load %arg3[%c0_8, %c0_9] : memref<128x32xf32, #tpu.memory_space<vmem>>, vector<64x32xf32>
    %c64_10 = arith.constant 64 : index
    %c0_11 = arith.constant 0 : index
    %9 = vector.load %arg3[%c64_10, %c0_11] : memref<128x32xf32, #tpu.memory_space<vmem>>, vector<64x16xf32>
    %cst = arith.constant dense<0.000000e+00> : vector<16x32xf32>
    %10 = tpu.matmul %1, %2, %cst {dimension_numbers = #tpu.dot_dimension_numbers<[1], [0], [0], [1], [0, 0, 1, 1], [], []>} : vector<16x32xbf16>, vector<32x32xbf16>, vector<16x32xf32> -> vector<16x32xf32>
    %cst_12 = arith.constant dense<0.000000e+00> : vector<16x32xf32>
    %11 = tpu.matmul %1, %3, %cst_12 {dimension_numbers = #tpu.dot_dimension_numbers<[1], [0], [0], [1], [0, 0, 1, 1], [], []>} : vector<16x32xbf16>, vector<32x32xbf16>, vector<16x32xf32> -> vector<16x32xf32>
    %12 = arith.truncf %11 : vector<16x32xf32> to vector<16x32xbf16>
    %cst_13 = arith.constant dense<0.000000e+00> : vector<16x32xf32>
    %13 = tpu.matmul %1, %4, %cst_13 {dimension_numbers = #tpu.dot_dimension_numbers<[1], [0], [0], [1], [0, 0, 1, 1], [], []>} : vector<16x32xbf16>, vector<32x32xbf16>, vector<16x32xf32> -> vector<16x32xf32>
    %14 = arith.truncf %13 : vector<16x32xf32> to vector<16x32xbf16>
    %15 = tpu.concatenate %10, %10, %10, %10 in 0 : vector<16x32xf32>, vector<16x32xf32>, vector<16x32xf32>, vector<16x32xf32> -> vector<64x32xf32>
    %16 = arith.mulf %15, %8 : vector<64x32xf32>
    %17 = arith.truncf %16 : vector<64x32xf32> to vector<64x32xbf16>
    %cst_14 = arith.constant dense<0.000000e+00> : vector<64x16xf32>
    %18 = tpu.matmul %17, %12, %cst_14 {dimension_numbers = #tpu.dot_dimension_numbers<[1], [1], [0], [0], [0, 0, 1, 0], [], []>} : vector<64x32xbf16>, vector<16x32xbf16>, vector<64x16xf32> -> vector<64x16xf32>
    %c0_15 = arith.constant 0 : index
    %c0_16 = arith.constant 0 : index
    %19 = vector.load %arg1[%c0_15, %c0_16] : memref<1x16xf32, #tpu.memory_space<vmem>>, vector<1x16xf32>
    %cst_17 = arith.constant 0.000000e+00 : f32
    %20 = vector.broadcast %cst_17 : f32 to vector<1x16xf32>
    %21 = arith.cmpf one, %19, %20 : vector<1x16xf32>
    %cst_18 = arith.constant -1.000000e+06 : f32
    %22 = vector.shape_cast %21 : vector<1x16xi1> to vector<1x16xi1>
    %23 = vector.broadcast %22 : vector<1x16xi1> to vector<64x16xi1>
    %24 = vector.broadcast %cst_18 : f32 to vector<64x16xf32>
    %25 = arith.select %23, %18, %24 : vector<64x16xi1>, vector<64x16xf32>
    %26 = arith.addf %25, %9 : vector<64x16xf32>
    %cst_19 = arith.constant dense<0xFF800000> : vector<64xf32>
    %27 = vector.multi_reduction <maximumf>, %26, %cst_19 [1] : vector<64x16xf32> to vector<64xf32>
    %28 = vector.shape_cast %27 : vector<64xf32> to vector<64x1xf32>
    %29 = vector.broadcast %28 : vector<64x1xf32> to vector<64x16xf32>
    %30 = arith.subf %26, %29 : vector<64x16xf32>
    %31 = math.exp %30 : vector<64x16xf32>
    %cst_20 = arith.constant dense<0.000000e+00> : vector<64xf32>
    %32 = vector.multi_reduction <add>, %31, %cst_20 [1] : vector<64x16xf32> to vector<64xf32>
    %33 = vector.shape_cast %32 : vector<64xf32> to vector<64x1xf32>
    %34 = tpu.reciprocal %33 {approx = true} : vector<64x1xf32> -> vector<64x1xf32>
    %35 = vector.broadcast %34 : vector<64x1xf32> to vector<64x16xf32>
    %36 = arith.mulf %31, %35 : vector<64x16xf32>
    %37 = arith.truncf %36 : vector<64x16xf32> to vector<64x16xbf16>
    %cst_21 = arith.constant dense<0.000000e+00> : vector<64x32xf32>
    %38 = tpu.matmul %37, %14, %cst_21 {dimension_numbers = #tpu.dot_dimension_numbers<[1], [0], [0], [1], [0, 0, 1, 1], [], []>} : vector<64x16xbf16>, vector<16x32xbf16>, vector<64x32xf32> -> vector<64x32xf32>
    %39 = arith.mulf %38, %8 : vector<64x32xf32>
    %40 = vector.extract_strided_slice %39 {offsets = [0, 0], sizes = [16, 32], strides = [1, 1]} : vector<64x32xf32> to vector<16x32xf32>
    %41 = vector.extract_strided_slice %39 {offsets = [16, 0], sizes = [16, 32], strides = [1, 1]} : vector<64x32xf32> to vector<16x32xf32>
    %42 = arith.addf %40, %41 : vector<16x32xf32>
    %43 = vector.extract_strided_slice %39 {offsets = [32, 0], sizes = [16, 32], strides = [1, 1]} : vector<64x32xf32> to vector<16x32xf32>
    %44 = arith.addf %42, %43 : vector<16x32xf32>
    %45 = vector.extract_strided_slice %39 {offsets = [48, 0], sizes = [16, 32], strides = [1, 1]} : vector<64x32xf32> to vector<16x32xf32>
    %46 = arith.addf %44, %45 : vector<16x32xf32>
    %47 = arith.truncf %46 : vector<16x32xf32> to vector<16x32xbf16>
    %cst_22 = arith.constant dense<0.000000e+00> : vector<16x32xf32>
    %48 = tpu.matmul %47, %5, %cst_22 {dimension_numbers = #tpu.dot_dimension_numbers<[1], [0], [0], [1], [0, 0, 1, 1], [], []>} : vector<16x32xbf16>, vector<32x32xbf16>, vector<16x32xf32> -> vector<16x32xf32>
    %c0_23 = arith.constant 0 : index
    %c0_24 = arith.constant 0 : index
    %49 = vector.load %arg4[%c0_23, %c0_24] : memref<6x64xf32, #tpu.memory_space<vmem>>, vector<1x32xf32>
    %c1 = arith.constant 1 : index
    %c0_25 = arith.constant 0 : index
    %50 = vector.load %arg4[%c1, %c0_25] : memref<6x64xf32, #tpu.memory_space<vmem>>, vector<1x32xf32>
    %c2 = arith.constant 2 : index
    %c0_26 = arith.constant 0 : index
    %51 = vector.load %arg4[%c2, %c0_26] : memref<6x64xf32, #tpu.memory_space<vmem>>, vector<1x64xf32>
    %c3 = arith.constant 3 : index
    %c0_27 = arith.constant 0 : index
    %52 = vector.load %arg4[%c3, %c0_27] : memref<6x64xf32, #tpu.memory_space<vmem>>, vector<1x32xf32>
    %c4 = arith.constant 4 : index
    %c0_28 = arith.constant 0 : index
    %53 = vector.load %arg4[%c4, %c0_28] : memref<6x64xf32, #tpu.memory_space<vmem>>, vector<1x32xf32>
    %c5 = arith.constant 5 : index
    %c0_29 = arith.constant 0 : index
    %54 = vector.load %arg4[%c5, %c0_29] : memref<6x64xf32, #tpu.memory_space<vmem>>, vector<1x32xf32>
    %55 = arith.addf %48, %0 : vector<16x32xf32>
    %cst_30 = arith.constant dense<0.000000e+00> : vector<16xf32>
    %56 = vector.multi_reduction <add>, %55, %cst_30 [1] : vector<16x32xf32> to vector<16xf32>
    %57 = vector.shape_cast %56 : vector<16xf32> to vector<16x1xf32>
    %cst_31 = arith.constant 3.200000e+01 : f32
    %58 = vector.broadcast %cst_31 : f32 to vector<16x1xf32>
    %59 = arith.divf %57, %58 : vector<16x1xf32>
    %60 = vector.broadcast %59 : vector<16x1xf32> to vector<16x32xf32>
    %61 = arith.subf %55, %60 : vector<16x32xf32>
    %62 = vector.broadcast %59 : vector<16x1xf32> to vector<16x32xf32>
    %63 = arith.subf %55, %62 : vector<16x32xf32>
    %64 = arith.mulf %61, %63 : vector<16x32xf32>
    %cst_32 = arith.constant dense<0.000000e+00> : vector<16xf32>
    %65 = vector.multi_reduction <add>, %64, %cst_32 [1] : vector<16x32xf32> to vector<16xf32>
    %66 = vector.shape_cast %65 : vector<16xf32> to vector<16x1xf32>
    %cst_33 = arith.constant 3.200000e+01 : f32
    %67 = vector.broadcast %cst_33 : f32 to vector<16x1xf32>
    %68 = arith.divf %66, %67 : vector<16x1xf32>
    %69 = vector.broadcast %59 : vector<16x1xf32> to vector<16x32xf32>
    %70 = arith.subf %55, %69 : vector<16x32xf32>
    %cst_34 = arith.constant 9.99999974E-6 : f32
    %71 = vector.broadcast %cst_34 : f32 to vector<16x1xf32>
    %72 = arith.addf %68, %71 : vector<16x1xf32>
    %73 = math.rsqrt %72 : vector<16x1xf32>
    %74 = vector.broadcast %73 : vector<16x1xf32> to vector<16x32xf32>
    %75 = arith.mulf %70, %74 : vector<16x32xf32>
    %76 = vector.broadcast %49 : vector<1x32xf32> to vector<16x32xf32>
    %77 = arith.mulf %75, %76 : vector<16x32xf32>
    %78 = vector.broadcast %50 : vector<1x32xf32> to vector<16x32xf32>
    %79 = arith.addf %77, %78 : vector<16x32xf32>
    %80 = arith.truncf %79 : vector<16x32xf32> to vector<16x32xbf16>
    %cst_35 = arith.constant dense<0.000000e+00> : vector<16x64xf32>
    %81 = tpu.matmul %80, %6, %cst_35 {dimension_numbers = #tpu.dot_dimension_numbers<[1], [0], [0], [1], [0, 0, 1, 1], [], []>} : vector<16x32xbf16>, vector<32x64xbf16>, vector<16x64xf32> -> vector<16x64xf32>
    %82 = vector.broadcast %51 : vector<1x64xf32> to vector<16x64xf32>
    %83 = arith.addf %81, %82 : vector<16x64xf32>
    %cst_36 = arith.constant 0.000000e+00 : f32
    %84 = vector.broadcast %cst_36 : f32 to vector<16x64xf32>
    %85 = arith.maximumf %83, %84 : vector<16x64xf32>
    %86 = arith.truncf %85 : vector<16x64xf32> to vector<16x64xbf16>
    %cst_37 = arith.constant dense<0.000000e+00> : vector<16x32xf32>
    %87 = tpu.matmul %86, %7, %cst_37 {dimension_numbers = #tpu.dot_dimension_numbers<[1], [0], [0], [1], [0, 0, 1, 1], [], []>} : vector<16x64xbf16>, vector<64x32xbf16>, vector<16x32xf32> -> vector<16x32xf32>
    %88 = vector.broadcast %52 : vector<1x32xf32> to vector<16x32xf32>
    %89 = arith.addf %87, %88 : vector<16x32xf32>
    %90 = arith.addf %89, %79 : vector<16x32xf32>
    %cst_38 = arith.constant dense<0.000000e+00> : vector<16xf32>
    %91 = vector.multi_reduction <add>, %90, %cst_38 [1] : vector<16x32xf32> to vector<16xf32>
    %92 = vector.shape_cast %91 : vector<16xf32> to vector<16x1xf32>
    %cst_39 = arith.constant 3.200000e+01 : f32
    %93 = vector.broadcast %cst_39 : f32 to vector<16x1xf32>
    %94 = arith.divf %92, %93 : vector<16x1xf32>
    %95 = vector.broadcast %94 : vector<16x1xf32> to vector<16x32xf32>
    %96 = arith.subf %90, %95 : vector<16x32xf32>
    %97 = vector.broadcast %94 : vector<16x1xf32> to vector<16x32xf32>
    %98 = arith.subf %90, %97 : vector<16x32xf32>
    %99 = arith.mulf %96, %98 : vector<16x32xf32>
    %cst_40 = arith.constant dense<0.000000e+00> : vector<16xf32>
    %100 = vector.multi_reduction <add>, %99, %cst_40 [1] : vector<16x32xf32> to vector<16xf32>
    %101 = vector.shape_cast %100 : vector<16xf32> to vector<16x1xf32>
    %cst_41 = arith.constant 3.200000e+01 : f32
    %102 = vector.broadcast %cst_41 : f32 to vector<16x1xf32>
    %103 = arith.divf %101, %102 : vector<16x1xf32>
    %104 = vector.broadcast %94 : vector<16x1xf32> to vector<16x32xf32>
    %105 = arith.subf %90, %104 : vector<16x32xf32>
    %cst_42 = arith.constant 9.99999974E-6 : f32
    %106 = vector.broadcast %cst_42 : f32 to vector<16x1xf32>
    %107 = arith.addf %103, %106 : vector<16x1xf32>
    %108 = math.rsqrt %107 : vector<16x1xf32>
    %109 = vector.broadcast %108 : vector<16x1xf32> to vector<16x32xf32>
    %110 = arith.mulf %105, %109 : vector<16x32xf32>
    %111 = vector.broadcast %53 : vector<1x32xf32> to vector<16x32xf32>
    %112 = arith.mulf %110, %111 : vector<16x32xf32>
    %113 = vector.broadcast %54 : vector<1x32xf32> to vector<16x32xf32>
    %114 = arith.addf %112, %113 : vector<16x32xf32>
    %c0_43 = arith.constant 0 : index
    %c0_44 = arith.constant 0 : index
    %115 = vector.load %arg5[%c0_43, %c0_44] : memref<16x32xf32, #tpu.memory_space<vmem>>, vector<16x32xf32>
    tpu.vector_store %arg5[%c0_43, %c0_44], %114 {strides = array<i32>} : memref<16x32xf32, #tpu.memory_space<vmem>>, vector<16x32xf32>,
    return
  }
}

</mosaic_0001>

<llo_original>
// kernel: tpu_custom_call.1
$region0: #{tpu_custom_call.1}
  #allocation0 [shape = 'u32[]', space=smem, size = 0x4, offset = 0x4, fixed_abs, tag = 'smem constant byte address 0x4 - core index']
  #allocation1 [shape = 'u32[144,128]{1,0:T(1,128)}', space=vmem, size = 0x12000, scoped, tag = 'internal scratch']
  %s0 = inlined_call_operand.vmem [shape: f32[16,32], index: 0, kind: input, shape index: {}]
  %s1 = inlined_call_operand.vmem [shape: f32[1,16], index: 1, kind: input, shape index: {}]
  %s2 = inlined_call_operand.vmem [shape: bf16[224,64], index: 2, kind: input, shape index: {}]
  %s3 = inlined_call_operand.vmem [shape: f32[128,32], index: 3, kind: input, shape index: {}]
  %s4 = inlined_call_operand.vmem [shape: f32[6,64], index: 4, kind: input, shape index: {}]
  %s5 = inlined_call_operand.hbm [shape: f32[16,32], index: 5, kind: output, shape index: {}]
  %s6 = sld [smem:[#allocation0]]
  $region30: #{tpu_custom_call.1} parent=0
    _
  %s8 = ssub.s32 1, %s6
  %s9 = scalar_select 0, %s8, %s6
  $region1: #{tpu_custom_call.1} parent=0
    #allocation2 [shape = 'u8[8192]{0}', space=vmem, size = 0x2000, scoped, tag = 'output window, operand 0, single buffered']
    #allocation3 [shape = 's32[1]{0}', space=sflag, size = 0x4, scoped, tag = 'scoped memory for tpu_custom_call.1']
    %10 = vsyncpa [#allocation3], 0
    // Predicated region
    $region2: #{tpu_custom_call.1} parent=1 // pred_check
      _
    $region3: #{tpu_custom_call.1} parent=1 // pred_check_branch
      %12 = sbr.rel (0) target = $region5
    $region4: #{tpu_custom_call.1} parent=1 // pred_region
      _
    $region5: #{tpu_custom_call.1} parent=1 // pred_fallthru
      _
    // Predicated region
    $region6: #{tpu_custom_call.1} parent=1 // pred_check
      _
    $region7: #{tpu_custom_call.1} parent=1 // pred_check_branch
      %14 = sbr.rel (0) target = $region9
    $region8: #{tpu_custom_call.1} parent=1 // pred_region
      _
    $region9: #{tpu_custom_call.1} parent=1 // pred_fallthru
      _
    // Predicated region
    $region10: #{tpu_custom_call.1} parent=1 // pred_check
      _
    $region11: #{tpu_custom_call.1} parent=1 // pred_check_branch
      %16 = sbr.rel (0) target = $region13
    $region12: #{tpu_custom_call.1} parent=1 // pred_region
      _
    $region13: #{tpu_custom_call.1} parent=1 // pred_fallthru
      _
    // Predicated region
    $region14: #{tpu_custom_call.1} parent=1 // pred_check
      _
    $region15: #{tpu_custom_call.1} parent=1 // pred_check_branch
      %18 = sbr.rel (0) target = $region17
    $region16: #{tpu_custom_call.1} parent=1 // pred_region
      _
    $region17: #{tpu_custom_call.1} parent=1 // pred_fallthru
      _
    // Predicated region
    $region18: #{tpu_custom_call.1} parent=1 // pred_check
      _
    $region19: #{tpu_custom_call.1} parent=1 // pred_check_branch
      %20 = sbr.rel (0) target = $region21
    $region20: #{tpu_custom_call.1} parent=1 // pred_region
      _
    $region21: #{tpu_custom_call.1} parent=1 // pred_fallthru
      _
    %v22 = vld [vmem:[%s0] sm:$0xff]
    %v23 = vld [vmem:[%s0 + $0x8] sm:$0xff]
    %v24 = vpack.c.bf16 %v23, %v22
    %v25 = vld [vmem:[%s2] sm:$0xf]
    %v26 = vld [vmem:[%s2 + $0x4] sm:$0xf]
    %v27 = vld [vmem:[%s2 + $0x8] sm:$0xf]
    %v28 = vld [vmem:[%s2 + $0xc] sm:$0xf]
    %v29 = vld [vmem:[%s2 + $0x10] sm:$0xf]
    %v30 = vld [vmem:[%s2 + $0x14] sm:$0xf]
    %v31 = vld [vmem:[%s2 + $0x18] sm:$0xf]
    %v32 = vld [vmem:[%s2 + $0x1c] sm:$0xf]
    %v33 = vld [vmem:[%s2 + $0x20] sm:$0xf]
    %v34 = vld [vmem:[%s2 + $0x24] sm:$0xf]
    %v35 = vld [vmem:[%s2 + $0x28] sm:$0xf]
    %v36 = vld [vmem:[%s2 + $0x2c] sm:$0xf]
    %v37 = vld [vmem:[%s2 + $0x30] sm:$0xf]
    %v38 = vld [vmem:[%s2 + $0x34] sm:$0xf]
    %v39 = vld [vmem:[%s2 + $0x38] sm:$0xf]
    %v40 = vld [vmem:[%s2 + $0x3c] sm:$0xf]
    %v41 = vld [vmem:[%s2 + $0x40] sm:$0xf]
    %v42 = vld [vmem:[%s2 + $0x44] sm:$0xf]
    %v43 = vld [vmem:[%s2 + $0x48] sm:$0xf]
    %v44 = vld [vmem:[%s2 + $0x4c] sm:$0xf]
    %v45 = vld [vmem:[%s2 + $0x50] sm:$0xf]
    %v46 = vld [vmem:[%s2 + $0x54] sm:$0xf]
    %v47 = vld [vmem:[%s2 + $0x58] sm:$0xf]
    %v48 = vld [vmem:[%s2 + $0x5c] sm:$0xf]
    %v49 = vld [vmem:[%s2 + $0x60] sm:$0xf]
    %v50 = vld [vmem:[%s2 + $0x64] sm:$0xf]
    %v51 = vld [vmem:[%s2 + $0x68] sm:$0xf]
    %v52 = vld [vmem:[%s2 + $0x6c] sm:$0xf]
    %v53 = vld [vmem:[%s3] sm:$0xff]
    %v54 = vld [vmem:[%s3 + $0x8] sm:$0xff]
    %v55 = vld [vmem:[%s3 + $0x10] sm:$0xff]
    %v56 = vld [vmem:[%s3 + $0x18] sm:$0xff]
    %v57 = vld [vmem:[%s3 + $0x20] sm:$0xff]
    %v58 = vld [vmem:[%s3 + $0x28] sm:$0xff]
    %v59 = vld [vmem:[%s3 + $0x30] sm:$0xff]
    %v60 = vld [vmem:[%s3 + $0x38] sm:$0xff]
    %v61 = vld [vmem:[%s3 + $0x40] sm:$0xff]
    %v62 = vld [vmem:[%s3 + $0x48] sm:$0xff]
    %v63 = vld [vmem:[%s3 + $0x50] sm:$0xff]
    %v64 = vld [vmem:[%s3 + $0x58] sm:$0xff]
    %v65 = vld [vmem:[%s3 + $0x60] sm:$0xff]
    %v66 = vld [vmem:[%s3 + $0x68] sm:$0xff]
    %v67 = vld [vmem:[%s3 + $0x70] sm:$0xff]
    %v68 = vld [vmem:[%s3 + $0x78] sm:$0xff]
    %v73 = vunpack.c.l.b16 %v25
    %v74 = vunpack.c.l.b16 %v26
    %v75 = vunpack.c.l.b16 %v27
    %v76 = vunpack.c.l.b16 %v28
    %v77 = vpack.c.b16 %v74, %v73
    %v78 = vpack.c.b16 %v76, %v75
    %vm81 = vcmask 261120
    %v83 = vsel %vm81, %v24, 0
    %85 = vmatprep.subr.bf16.mxu0 0
    %86 = vmatpush1.bf16.msra.mxu0 0
    %87 = vmatprep.subr.bf16.mxu0 0
    %88 = vmatpush1.bf16.msra.mxu0 0
    %89 = vmatprep.subr.bf16.mxu0 0
    %90 = vmatpush1.bf16.msra.mxu0 0
    %91 = vmatprep.subr.bf16.mxu0 0
    %92 = vmatpush1.bf16.msra.mxu0 0
    %93 = vmatprep.subr.bf16.mxu0 0
    %94 = vmatpush1.bf16.msra.mxu0 0
    %95 = vmatprep.subr.bf16.mxu0 0
    %96 = vmatpush1.bf16.msra.mxu0 0
    %97 = vmatprep.subr.bf16.mxu0 0
    %98 = vmatpush1.bf16.msra.mxu0 %v78
    %99 = vmatprep.subr.bf16.mxu0 0
    %100 = vmatpush1.bf16.msra.mxu0 %v77
    %101 = vmatprep.subr.bf16.mxu0 0
    %102 = vmatpush2.bf16.msra.mxu0 0
    %103 = vmatprep.subr.bf16.mxu0 0
    %104 = vmatpush2.bf16.msra.mxu0 0
    %105 = vmatprep.subr.bf16.mxu0 0
    %106 = vmatpush2.bf16.msra.mxu0 0
    %107 = vmatprep.subr.bf16.mxu0 0
    %108 = vmatpush2.bf16.msra.mxu0 0
    %109 = vmatprep.subr.bf16.mxu0 0
    %110 = vmatpush2.bf16.msra.mxu0 0
    %111 = vmatprep.subr.bf16.mxu0 0
    %112 = vmatpush2.bf16.msra.mxu0 0
    %113 = vmatprep.subr.bf16.mxu0 0
    %114 = vmatpush2.bf16.msra.mxu0 0
    %115 = vmatprep.subr.bf16.mxu0 0
    %116 = vmatpush2.bf16.msra.mxu0 0
    %117 = vmatprep.mubr.bf16.mxu0 0
    %118 = vmatmul.mubr.bf16.gmra.mxu0 %v83
    %v119 = vpop.f32.mrf.mxu0
    %v120 = vadd.f32 0.0, %v119
    %v121 = vpop.f32.mrf.mxu0
    %v122 = vpop.f32.mrf.mxu0
    %v123 = vadd.f32 0.0, %v122
    %v124 = vpop.f32.mrf.mxu0
    %125 = vdwg.mxu0
    %v130 = vunpack.c.l.b16 %v29
    %v131 = vunpack.c.l.b16 %v30
    %v132 = vunpack.c.l.b16 %v31
    %v133 = vunpack.c.l.b16 %v32
    %v134 = vpack.c.b16 %v131, %v130
    %v135 = vpack.c.b16 %v133, %v132
    %138 = vmatprep.subr.bf16.mxu0 0
    %139 = vmatpush1.bf16.msra.mxu0 0
    %140 = vmatprep.subr.bf16.mxu0 0
    %141 = vmatpush1.bf16.msra.mxu0 0
    %142 = vmatprep.subr.bf16.mxu0 0
    %143 = vmatpush1.bf16.msra.mxu0 0
    %144 = vmatprep.subr.bf16.mxu0 0
    %145 = vmatpush1.bf16.msra.mxu0 0
    %146 = vmatprep.subr.bf16.mxu0 0
    %147 = vmatpush1.bf16.msra.mxu0 0
    %148 = vmatprep.subr.bf16.mxu0 0
    %149 = vmatpush1.bf16.msra.mxu0 0
    %150 = vmatprep.subr.bf16.mxu0 0
    %151 = vmatpush1.bf16.msra.mxu0 %v135
    %152 = vmatprep.subr.bf16.mxu0 0
    %153 = vmatpush1.bf16.msra.mxu0 %v134
    %154 = vmatprep.subr.bf16.mxu0 0
    %155 = vmatpush2.bf16.msra.mxu0 0
    %156 = vmatprep.subr.bf16.mxu0 0
    %157 = vmatpush2.bf16.msra.mxu0 0
    %158 = vmatprep.subr.bf16.mxu0 0
    %159 = vmatpush2.bf16.msra.mxu0 0
    %160 = vmatprep.subr.bf16.mxu0 0
    %161 = vmatpush2.bf16.msra.mxu0 0
    %162 = vmatprep.subr.bf16.mxu0 0
    %163 = vmatpush2.bf16.msra.mxu0 0
    %164 = vmatprep.subr.bf16.mxu0 0
    %165 = vmatpush2.bf16.msra.mxu0 0
    %166 = vmatprep.subr.bf16.mxu0 0
    %167 = vmatpush2.bf16.msra.mxu0 0
    %168 = vmatprep.subr.bf16.mxu0 0
    %169 = vmatpush2.bf16.msra.mxu0 0
    %170 = vmatprep.mubr.bf16.mxu0 0
    %171 = vmatmul.mubr.bf16.gmra.mxu0 %v83
    %v172 = vpop.f32.mrf.mxu0
    %v173 = vadd.f32 0.0, %v172
    %v174 = vpop.f32.mrf.mxu0
    %v175 = vpop.f32.mrf.mxu0
    %v176 = vadd.f32 0.0, %v175
    %v177 = vpop.f32.mrf.mxu0
    %178 = vdwg.mxu0
    %v179 = vpack.c.bf16 %v176, %v173
    %v184 = vunpack.c.l.b16 %v33
    %v185 = vunpack.c.l.b16 %v34
    %v186 = vunpack.c.l.b16 %v35
    %v187 = vunpack.c.l.b16 %v36
    %v188 = vpack.c.b16 %v185, %v184
    %v189 = vpack.c.b16 %v187, %v186
    %192 = vmatprep.subr.bf16.mxu0 0
    %193 = vmatpush1.bf16.msra.mxu0 0
    %194 = vmatprep.subr.bf16.mxu0 0
    %195 = vmatpush1.bf16.msra.mxu0 0
    %196 = vmatprep.subr.bf16.mxu0 0
    %197 = vmatpush1.bf16.msra.mxu0 0
    %198 = vmatprep.subr.bf16.mxu0 0
    %199 = vmatpush1.bf16.msra.mxu0 0
    %200 = vmatprep.subr.bf16.mxu0 0
    %201 = vmatpush1.bf16.msra.mxu0 0
    %202 = vmatprep.subr.bf16.mxu0 0
    %203 = vmatpush1.bf16.msra.mxu0 0
    %204 = vmatprep.subr.bf16.mxu0 0
    %205 = vmatpush1.bf16.msra.mxu0 %v189
    %206 = vmatprep.subr.bf16.mxu0 0
    %207 = vmatpush1.bf16.msra.mxu0 %v188
    %208 = vmatprep.subr.bf16.mxu0 0
    %209 = vmatpush2.bf16.msra.mxu0 0
    %210 = vmatprep.subr.bf16.mxu0 0
    %211 = vmatpush2.bf16.msra.mxu0 0
    %212 = vmatprep.subr.bf16.mxu0 0
    %213 = vmatpush2.bf16.msra.mxu0 0
    %214 = vmatprep.subr.bf16.mxu0 0
    %215 = vmatpush2.bf16.msra.mxu0 0
    %216 = vmatprep.subr.bf16.mxu0 0
    %217 = vmatpush2.bf16.msra.mxu0 0
    %218 = vmatprep.subr.bf16.mxu0 0
    %219 = vmatpush2.bf16.msra.mxu0 0
    %220 = vmatprep.subr.bf16.mxu0 0
    %221 = vmatpush2.bf16.msra.mxu0 0
    %222 = vmatprep.subr.bf16.mxu0 0
    %223 = vmatpush2.bf16.msra.mxu0 0
    %224 = vmatprep.mubr.bf16.mxu0 0
    %225 = vmatmul.mubr.bf16.gmra.mxu0 %v83
    %v226 = vpop.f32.mrf.mxu0
    %v227 = vadd.f32 0.0, %v226
    %v228 = vpop.f32.mrf.mxu0
    %v229 = vpop.f32.mrf.mxu0
    %v230 = vadd.f32 0.0, %v229
    %v231 = vpop.f32.mrf.mxu0
    %232 = vdwg.mxu0
    %v233 = vpack.c.bf16 %v230, %v227
    %v234 = vmul.f32 %v120, %v53
    %v235 = vmul.f32 %v123, %v54
    %v236 = vmul.f32 %v120, %v55
    %v237 = vmul.f32 %v123, %v56
    %v238 = vmul.f32 %v120, %v57
    %v239 = vmul.f32 %v123, %v58
    %v240 = vmul.f32 %v120, %v59
    %v241 = vmul.f32 %v123, %v60
    %v242 = vpack.c.bf16 %v235, %v234
    %v243 = vpack.c.bf16 %v237, %v236
    %v244 = vpack.c.bf16 %v239, %v238
    %v245 = vpack.c.bf16 %v241, %v240
    %v247 = vsel %vm81, %v242, 0
    %v250 = vsel %vm81, %v243, 0
    %v253 = vsel %vm81, %v244, 0
    %v256 = vsel %vm81, %v245, 0
    %v259 = vsel %vm81, %v179, 0
    %261 = vmatprep.subr.bf16.mxu0 0
    %262 = vmatpush1.bf16.xpose.msra.mxu0 0
    %263 = vmatprep.subr.bf16.mxu0 0
    %264 = vmatpush1.bf16.xpose.msra.mxu0 0
    %265 = vmatprep.subr.bf16.mxu0 0
    %266 = vmatpush1.bf16.xpose.msra.mxu0 0
    %267 = vmatprep.subr.bf16.mxu0 0
    %268 = vmatpush1.bf16.xpose.msra.mxu0 0
    %269 = vmatprep.subr.bf16.mxu0 0
    %270 = vmatpush1.bf16.xpose.msra.mxu0 0
    %271 = vmatprep.subr.bf16.mxu0 0
    %272 = vmatpush1.bf16.xpose.msra.mxu0 0
    %273 = vmatprep.subr.bf16.mxu0 0
    %274 = vmatpush1.bf16.xpose.msra.mxu0 0
    %275 = vmatprep.subr.bf16.mxu0 0
    %276 = vmatpush1.bf16.xpose.msra.mxu0 %v259
    %277 = vmatprep.subr.bf16.mxu0 0
    %278 = vmatpush2.bf16.xpose.msra.mxu0 0
    %279 = vmatprep.subr.bf16.mxu0 0
    %280 = vmatpush2.bf16.xpose.msra.mxu0 0
    %281 = vmatprep.subr.bf16.mxu0 0
    %282 = vmatpush2.bf16.xpose.msra.mxu0 0
    %283 = vmatprep.subr.bf16.mxu0 0
    %284 = vmatpush2.bf16.xpose.msra.mxu0 0
    %285 = vmatprep.subr.bf16.mxu0 0
    %286 = vmatpush2.bf16.xpose.msra.mxu0 0
    %287 = vmatprep.subr.bf16.mxu0 0
    %288 = vmatpush2.bf16.xpose.msra.mxu0 0
    %289 = vmatprep.subr.bf16.mxu0 0
    %290 = vmatpush2.bf16.xpose.msra.mxu0 0
    %291 = vmatprep.subr.bf16.mxu0 0
    %292 = vmatpush2.bf16.xpose.msra.mxu0 0
    %293 = vmatprep.mubr.bf16.mxu0 0
    %294 = vmatmul.mubr.bf16.gmra.mxu0 %v247
    %v295 = vpop.f32.mrf.mxu0
    %v296 = vadd.f32 0.0, %v295
    %v297 = vpop.f32.mrf.mxu0
    %v298 = vpop.f32.mrf.mxu0
    %v299 = vadd.f32 0.0, %v298
    %v300 = vpop.f32.mrf.mxu0
    %301 = vmatprep.mubr.bf16.mxu0 0
    %302 = vmatmul.mubr.bf16.gmra.mxu0 %v250
    %v303 = vpop.f32.mrf.mxu0
    %v304 = vadd.f32 0.0, %v303
    %v305 = vpop.f32.mrf.mxu0
    %v306 = vpop.f32.mrf.mxu0
    %v307 = vadd.f32 0.0, %v306
    %v308 = vpop.f32.mrf.mxu0
    %309 = vmatprep.mubr.bf16.mxu0 0
    %310 = vmatmul.mubr.bf16.gmra.mxu0 %v253
    %v311 = vpop.f32.mrf.mxu0
    %v312 = vadd.f32 0.0, %v311
    %v313 = vpop.f32.mrf.mxu0
    %v314 = vpop.f32.mrf.mxu0
    %v315 = vadd.f32 0.0, %v314
    %v316 = vpop.f32.mrf.mxu0
    %317 = vmatprep.mubr.bf16.mxu0 0
    %318 = vmatmul.mubr.bf16.gmra.mxu0 %v256
    %v319 = vpop.f32.mrf.mxu0
    %v320 = vadd.f32 0.0, %v319
    %v321 = vpop.f32.mrf.mxu0
    %v322 = vpop.f32.mrf.mxu0
    %v323 = vadd.f32 0.0, %v322
    %v324 = vpop.f32.mrf.mxu0
    %325 = vdwg.mxu0
    %v326 = vld [vmem:[%s1] sm:$0x1]
    %vm327 = vcmp.ne.f32.partialorder %v326, 0.0
    %v328 = vsel %vm327, 1, 0
    %v329 = vlaneseq
    %v330 = vshrl.u32 %v329, 7
    %v331 = vsub.s32 0, %v330
    %v332 = vrot.slane %v328, %v331
    %vm333 = vcmp.eq.s32.totalorder %v332, 1
    %v334 = vsel %vm333, %v296, -1000000.0
    %v335 = vsel %vm333, %v299, -1000000.0
    %v336 = vsel %vm333, %v304, -1000000.0
    %v337 = vsel %vm333, %v307, -1000000.0
    %v338 = vsel %vm333, %v312, -1000000.0
    %v339 = vsel %vm333, %v315, -1000000.0
    %v340 = vsel %vm333, %v320, -1000000.0
    %v341 = vsel %vm333, %v323, -1000000.0
    %v342 = vadd.f32 %v334, %v61
    %v343 = vadd.f32 %v335, %v62
    %v344 = vadd.f32 %v336, %v63
    %v345 = vadd.f32 %v337, %v64
    %v346 = vadd.f32 %v338, %v65
    %v347 = vadd.f32 %v339, %v66
    %v348 = vadd.f32 %v340, %v67
    %v349 = vadd.f32 %v341, %v68
    %vm350 = vcmask 130048
    %v351 = vsel %vm350, %v342, -inf
    %352 = vmax.xlane.f32.xlu0 %v351
    %v353 = vpop.xlane.xlu0 %352
    %v354 = vsel %vm350, %v343, -inf
    %355 = vmax.xlane.f32.xlu0 %v354
    %v356 = vpop.xlane.xlu0 %355
    %v357 = vsel %vm350, %v344, -inf
    %358 = vmax.xlane.f32.xlu0 %v357
    %v359 = vpop.xlane.xlu0 %358
    %v360 = vsel %vm350, %v345, -inf
    %361 = vmax.xlane.f32.xlu0 %v360
    %v362 = vpop.xlane.xlu0 %361
    %v363 = vsel %vm350, %v346, -inf
    %364 = vmax.xlane.f32.xlu0 %v363
    %v365 = vpop.xlane.xlu0 %364
    %v366 = vsel %vm350, %v347, -inf
    %367 = vmax.xlane.f32.xlu0 %v366
    %v368 = vpop.xlane.xlu0 %367
    %v369 = vsel %vm350, %v348, -inf
    %370 = vmax.xlane.f32.xlu0 %v369
    %v371 = vpop.xlane.xlu0 %370
    %v372 = vsel %vm350, %v349, -inf
    %373 = vmax.xlane.f32.xlu0 %v372
    %v374 = vpop.xlane.xlu0 %373
    %v375 = vsub.f32 %v342, %v353
    %v376 = vsub.f32 %v343, %v356
    %v377 = vsub.f32 %v344, %v359
    %v378 = vsub.f32 %v345, %v362
    %v379 = vsub.f32 %v346, %v365
    %v380 = vsub.f32 %v347, %v368
    %v381 = vsub.f32 %v348, %v371
    %v382 = vsub.f32 %v349, %v374
    %v383 = vmul.f32 %v375, 1.442695
    %v384 = vpow.pop %v383
    %v385 = vmul.f32 %v376, 1.442695
    %v386 = vpow.pop %v385
    %v387 = vmul.f32 %v377, 1.442695
    %v388 = vpow.pop %v387
    %v389 = vmul.f32 %v378, 1.442695
    %v390 = vpow.pop %v389
    %v391 = vmul.f32 %v379, 1.442695
    %v392 = vpow.pop %v391
    %v393 = vmul.f32 %v380, 1.442695
    %v394 = vpow.pop %v393
    %v395 = vmul.f32 %v381, 1.442695
    %v396 = vpow.pop %v395
    %v397 = vmul.f32 %v382, 1.442695
    %v398 = vpow.pop %v397
    %v399 = vsel %vm350, %v384, 0.0
    %400 = vadd.xlane.f32.xlu0 %v399
    %v401 = vpop.xlane.xlu0 %400
    %v402 = vsel %vm350, %v386, 0.0
    %403 = vadd.xlane.f32.xlu0 %v402
    %v404 = vpop.xlane.xlu0 %403
    %v405 = vsel %vm350, %v388, 0.0
    %406 = vadd.xlane.f32.xlu0 %v405
    %v407 = vpop.xlane.xlu0 %406
    %v408 = vsel %vm350, %v390, 0.0
    %409 = vadd.xlane.f32.xlu0 %v408
    %v410 = vpop.xlane.xlu0 %409
    %v411 = vsel %vm350, %v392, 0.0
    %412 = vadd.xlane.f32.xlu0 %v411
    %v413 = vpop.xlane.xlu0 %412
    %v414 = vsel %vm350, %v394, 0.0
    %415 = vadd.xlane.f32.xlu0 %v414
    %v416 = vpop.xlane.xlu0 %415
    %v417 = vsel %vm350, %v396, 0.0
    %418 = vadd.xlane.f32.xlu0 %v417
    %v419 = vpop.xlane.xlu0 %418
    %v420 = vsel %vm350, %v398, 0.0
    %421 = vadd.xlane.f32.xlu0 %v420
    %v422 = vpop.xlane.xlu0 %421
    %v423 = vrcp.pop %v401
    %v424 = vrcp.pop %v404
    %v425 = vrcp.pop %v407
    %v426 = vrcp.pop %v410
    %v427 = vrcp.pop %v413
    %v428 = vrcp.pop %v416
    %v429 = vrcp.pop %v419
    %v430 = vrcp.pop %v422
    %v431 = vmul.f32 %v384, %v423
    %v432 = vmul.f32 %v386, %v424
    %v433 = vmul.f32 %v388, %v425
    %v434 = vmul.f32 %v390, %v426
    %v435 = vmul.f32 %v392, %v427
    %v436 = vmul.f32 %v394, %v428
    %v437 = vmul.f32 %v396, %v429
    %v438 = vmul.f32 %v398, %v430
    %v439 = vpack.c.bf16 %v432, %v431
    %v440 = vpack.c.bf16 %v434, %v433
    %v441 = vpack.c.bf16 %v436, %v435
    %v442 = vpack.c.bf16 %v438, %v437
    %v444 = vsel %vm350, %v439, 0
    %v447 = vsel %vm350, %v440, 0
    %v450 = vsel %vm350, %v441, 0
    %v453 = vsel %vm350, %v442, 0
    %455 = vmatprep.subr.bf16.mxu0 0
    %456 = vmatpush1.bf16.msra.mxu0 0
    %457 = vmatprep.subr.bf16.mxu0 0
    %458 = vmatpush1.bf16.msra.mxu0 0
    %459 = vmatprep.subr.bf16.mxu0 0
    %460 = vmatpush1.bf16.msra.mxu0 0
    %461 = vmatprep.subr.bf16.mxu0 0
    %462 = vmatpush1.bf16.msra.mxu0 0
    %463 = vmatprep.subr.bf16.mxu0 0
    %464 = vmatpush1.bf16.msra.mxu0 0
    %465 = vmatprep.subr.bf16.mxu0 0
    %466 = vmatpush1.bf16.msra.mxu0 0
    %467 = vmatprep.subr.bf16.mxu0 0
    %468 = vmatpush1.bf16.msra.mxu0 0
    %469 = vmatprep.subr.bf16.mxu0 0
    %470 = vmatpush1.bf16.msra.mxu0 %v233
    %471 = vmatprep.subr.bf16.mxu0 0
    %472 = vmatpush2.bf16.msra.mxu0 0
    %473 = vmatprep.subr.bf16.mxu0 0
    %474 = vmatpush2.bf16.msra.mxu0 0
    %475 = vmatprep.subr.bf16.mxu0 0
    %476 = vmatpush2.bf16.msra.mxu0 0
    %477 = vmatprep.subr.bf16.mxu0 0
    %478 = vmatpush2.bf16.msra.mxu0 0
    %479 = vmatprep.subr.bf16.mxu0 0
    %480 = vmatpush2.bf16.msra.mxu0 0
    %481 = vmatprep.subr.bf16.mxu0 0
    %482 = vmatpush2.bf16.msra.mxu0 0
    %483 = vmatprep.subr.bf16.mxu0 0
    %484 = vmatpush2.bf16.msra.mxu0 0
    %485 = vmatprep.subr.bf16.mxu0 0
    %486 = vmatpush2.bf16.msra.mxu0 0
    %487 = vmatprep.mubr.bf16.mxu0 0
    %488 = vmatmul.mubr.bf16.gmra.mxu0 %v444
    %v489 = vpop.f32.mrf.mxu0
    %v490 = vadd.f32 0.0, %v489
    %v491 = vpop.f32.mrf.mxu0
    %v492 = vpop.f32.mrf.mxu0
    %v493 = vadd.f32 0.0, %v492
    %v494 = vpop.f32.mrf.mxu0
    %495 = vmatprep.mubr.bf16.mxu0 0
    %496 = vmatmul.mubr.bf16.gmra.mxu0 %v447
    %v497 = vpop.f32.mrf.mxu0
    %v498 = vadd.f32 0.0, %v497
    %v499 = vpop.f32.mrf.mxu0
    %v500 = vpop.f32.mrf.mxu0
    %v501 = vadd.f32 0.0, %v500
    %v502 = vpop.f32.mrf.mxu0
    %503 = vmatprep.mubr.bf16.mxu0 0
    %504 = vmatmul.mubr.bf16.gmra.mxu0 %v450
    %v505 = vpop.f32.mrf.mxu0
    %v506 = vadd.f32 0.0, %v505
    %v507 = vpop.f32.mrf.mxu0
    %v508 = vpop.f32.mrf.mxu0
    %v509 = vadd.f32 0.0, %v508
    %v510 = vpop.f32.mrf.mxu0
    %511 = vmatprep.mubr.bf16.mxu0 0
    %512 = vmatmul.mubr.bf16.gmra.mxu0 %v453
    %v513 = vpop.f32.mrf.mxu0
    %v514 = vadd.f32 0.0, %v513
    %v515 = vpop.f32.mrf.mxu0
    %v516 = vpop.f32.mrf.mxu0
    %v517 = vadd.f32 0.0, %v516
    %v518 = vpop.f32.mrf.mxu0
    %519 = vdwg.mxu0
    %v520 = vmul.f32 %v490, %v53
    %v521 = vmul.f32 %v493, %v54
    %v522 = vmul.f32 %v498, %v55
    %v523 = vmul.f32 %v501, %v56
    %v524 = vmul.f32 %v506, %v57
    %v525 = vmul.f32 %v509, %v58
    %v526 = vmul.f32 %v514, %v59
    %v527 = vmul.f32 %v517, %v60
    %v528 = vadd.f32 %v520, %v522
    %v529 = vadd.f32 %v521, %v523
    %v530 = vadd.f32 %v528, %v524
    %v531 = vadd.f32 %v529, %v525
    %v532 = vadd.f32 %v530, %v526
    %v533 = vadd.f32 %v531, %v527
    %v534 = vpack.c.bf16 %v533, %v532
    %v535 = vld [vmem:[%s4] sm:$0x1]
    %v536 = vld [vmem:[%s4 + $0x1] sm:$0x1]
    %v537 = vld [vmem:[%s4 + $0x2] sm:$0x1]
    %v538 = vld [vmem:[%s4 + $0x3] sm:$0x1]
    %v539 = vld [vmem:[%s4 + $0x4] sm:$0x1]
    %v540 = vld [vmem:[%s4 + $0x5] sm:$0x1]
    %v545 = vunpack.c.l.b16 %v37
    %v546 = vunpack.c.l.b16 %v38
    %v547 = vunpack.c.l.b16 %v39
    %v548 = vunpack.c.l.b16 %v40
    %v549 = vpack.c.b16 %v546, %v545
    %v550 = vpack.c.b16 %v548, %v547
    %v554 = vsel %vm81, %v534, 0
    %556 = vmatprep.subr.bf16.mxu0 0
    %557 = vmatpush1.bf16.msra.mxu0 0
    %558 = vmatprep.subr.bf16.mxu0 0
    %559 = vmatpush1.bf16.msra.mxu0 0
    %560 = vmatprep.subr.bf16.mxu0 0
    %561 = vmatpush1.bf16.msra.mxu0 0
    %562 = vmatprep.subr.bf16.mxu0 0
    %563 = vmatpush1.bf16.msra.mxu0 0
    %564 = vmatprep.subr.bf16.mxu0 0
    %565 = vmatpush1.bf16.msra.mxu0 0
    %566 = vmatprep.subr.bf16.mxu0 0
    %567 = vmatpush1.bf16.msra.mxu0 0
    %568 = vmatprep.subr.bf16.mxu0 0
    %569 = vmatpush1.bf16.msra.mxu0 %v550
    %570 = vmatprep.subr.bf16.mxu0 0
    %571 = vmatpush1.bf16.msra.mxu0 %v549
    %572 = vmatprep.subr.bf16.mxu0 0
    %573 = vmatpush2.bf16.msra.mxu0 0
    %574 = vmatprep.subr.bf16.mxu0 0
    %575 = vmatpush2.bf16.msra.mxu0 0
    %576 = vmatprep.subr.bf16.mxu0 0
    %577 = vmatpush2.bf16.msra.mxu0 0
    %578 = vmatprep.subr.bf16.mxu0 0
    %579 = vmatpush2.bf16.msra.mxu0 0
    %580 = vmatprep.subr.bf16.mxu0 0
    %581 = vmatpush2.bf16.msra.mxu0 0
    %582 = vmatprep.subr.bf16.mxu0 0
    %583 = vmatpush2.bf16.msra.mxu0 0
    %584 = vmatprep.subr.bf16.mxu0 0
    %585 = vmatpush2.bf16.msra.mxu0 0
    %586 = vmatprep.subr.bf16.mxu0 0
    %587 = vmatpush2.bf16.msra.mxu0 0
    %588 = vmatprep.mubr.bf16.mxu0 0
    %589 = vmatmul.mubr.bf16.gmra.mxu0 %v554
    %v590 = vpop.f32.mrf.mxu0
    %v591 = vadd.f32 %v22, %v590
    %v592 = vpop.f32.mrf.mxu0
    %v593 = vpop.f32.mrf.mxu0
    %v594 = vadd.f32 %v23, %v593
    %v595 = vpop.f32.mrf.mxu0
    %596 = vdwg.mxu0
    %v597 = vsel %vm81, %v591, 0.0
    %598 = vadd.xlane.f32.xlu0 %v597
    %v599 = vpop.xlane.xlu0 %598
    %v600 = vsel %vm81, %v594, 0.0
    %601 = vadd.xlane.f32.xlu0 %v600
    %v602 = vpop.xlane.xlu0 %601
    %v603 = vrcp.pop 32.0
    %v604 = vmul.f32 %v599, %v603
    %v605 = vmul.f32 %v602, %v603
    %v606 = vsub.f32 %v591, %v604
    %v607 = vsub.f32 %v594, %v605
    %v608 = vmul.f32 %v606, %v606
    %v609 = vmul.f32 %v607, %v607
    %v610 = vsel %vm81, %v608, 0.0
    %611 = vadd.xlane.f32.xlu0 %v610
    %v612 = vpop.xlane.xlu0 %611
    %v613 = vsel %vm81, %v609, 0.0
    %614 = vadd.xlane.f32.xlu0 %v613
    %v615 = vpop.xlane.xlu0 %614
    %v616 = vmul.f32 %v612, %v603
    %v617 = vmul.f32 %v615, %v603
    %v618 = vadd.f32 %v616, 1e-05
    %v619 = vadd.f32 %v617, 1e-05
    %v620 = vrsqrt.pop %v618
    %v621 = vrsqrt.pop %v619
    %v622 = vmul.f32 %v606, %v620
    %v623 = vmul.f32 %v607, %v621
    %v624 = vlaneseq
    %v625 = vshrl.u32 %v624, 7
    %v626 = vsub.s32 0, %v625
    %v627 = vrot.slane %v535, %v626
    %v628 = vmul.f32 %v622, %v627
    %v629 = vmul.f32 %v623, %v627
    %v630 = vlaneseq
    %v631 = vshrl.u32 %v630, 7
    %v632 = vsub.s32 0, %v631
    %v633 = vrot.slane %v536, %v632
    %v634 = vadd.f32 %v628, %v633
    %v635 = vadd.f32 %v629, %v633
    %v636 = vpack.c.bf16 %v635, %v634
    %v637 = vlaneseq
    %v638 = vshrl.u32 %v637, 7
    %v639 = vsub.s32 0, %v638
    %v640 = vrot.slane %v537, %v639
    %v645 = vunpack.c.l.b16 %v41
    %v646 = vunpack.c.l.b16 %v42
    %v647 = vunpack.c.l.b16 %v43
    %v648 = vunpack.c.l.b16 %v44
    %v649 = vpack.c.b16 %v646, %v645
    %v650 = vpack.c.b16 %v648, %v647
    %v654 = vsel %vm81, %v636, 0
    %656 = vmatprep.subr.bf16.mxu0 0
    %657 = vmatpush1.bf16.msra.mxu0 0
    %658 = vmatprep.subr.bf16.mxu0 0
    %659 = vmatpush1.bf16.msra.mxu0 0
    %660 = vmatprep.subr.bf16.mxu0 0
    %661 = vmatpush1.bf16.msra.mxu0 0
    %662 = vmatprep.subr.bf16.mxu0 0
    %663 = vmatpush1.bf16.msra.mxu0 0
    %664 = vmatprep.subr.bf16.mxu0 0
    %665 = vmatpush1.bf16.msra.mxu0 0
    %666 = vmatprep.subr.bf16.mxu0 0
    %667 = vmatpush1.bf16.msra.mxu0 0
    %668 = vmatprep.subr.bf16.mxu0 0
    %669 = vmatpush1.bf16.msra.mxu0 %v650
    %670 = vmatprep.subr.bf16.mxu0 0
    %671 = vmatpush1.bf16.msra.mxu0 %v649
    %672 = vmatprep.subr.bf16.mxu0 0
    %673 = vmatpush2.bf16.msra.mxu0 0
    %674 = vmatprep.subr.bf16.mxu0 0
    %675 = vmatpush2.bf16.msra.mxu0 0
    %676 = vmatprep.subr.bf16.mxu0 0
    %677 = vmatpush2.bf16.msra.mxu0 0
    %678 = vmatprep.subr.bf16.mxu0 0
    %679 = vmatpush2.bf16.msra.mxu0 0
    %680 = vmatprep.subr.bf16.mxu0 0
    %681 = vmatpush2.bf16.msra.mxu0 0
    %682 = vmatprep.subr.bf16.mxu0 0
    %683 = vmatpush2.bf16.msra.mxu0 0
    %684 = vmatprep.subr.bf16.mxu0 0
    %685 = vmatpush2.bf16.msra.mxu0 0
    %686 = vmatprep.subr.bf16.mxu0 0
    %687 = vmatpush2.bf16.msra.mxu0 0
    %688 = vmatprep.mubr.bf16.mxu0 0
    %689 = vmatmul.mubr.bf16.gmra.mxu0 %v654
    %v690 = vpop.f32.mrf.mxu0
    %v691 = vadd.f32 %v640, %v690
    %v692 = vpop.f32.mrf.mxu0
    %v693 = vpop.f32.mrf.mxu0
    %v694 = vadd.f32 %v640, %v693
    %v695 = vpop.f32.mrf.mxu0
    %696 = vdwg.mxu0
    %v697 = vmax.f32 %v691, 0.0
    %v698 = vmax.f32 %v694, 0.0
    %v699 = vpack.c.bf16 %v698, %v697
    %v700 = vlaneseq
    %v701 = vshrl.u32 %v700, 7
    %v702 = vsub.s32 0, %v701
    %v703 = vrot.slane %v538, %v702
    %v712 = vunpack.c.l.b16 %v45
    %v713 = vunpack.c.l.b16 %v46
    %v714 = vunpack.c.l.b16 %v47
    %v715 = vunpack.c.l.b16 %v48
    %v716 = vunpack.c.l.b16 %v49
    %v717 = vunpack.c.l.b16 %v50
    %v718 = vunpack.c.l.b16 %v51
    %v719 = vunpack.c.l.b16 %v52
    %v720 = vpack.c.b16 %v713, %v712
    %v721 = vpack.c.b16 %v715, %v714
    %v722 = vpack.c.b16 %v717, %v716
    %v723 = vpack.c.b16 %v719, %v718
    %vm728 = vcmask 523264
    %v730 = vsel %vm728, %v699, 0
    %732 = vmatprep.subr.bf16.mxu0 0
    %733 = vmatpush1.bf16.msra.mxu0 0
    %734 = vmatprep.subr.bf16.mxu0 0
    %735 = vmatpush1.bf16.msra.mxu0 0
    %736 = vmatprep.subr.bf16.mxu0 0
    %737 = vmatpush1.bf16.msra.mxu0 0
    %738 = vmatprep.subr.bf16.mxu0 0
    %739 = vmatpush1.bf16.msra.mxu0 0
    %740 = vmatprep.subr.bf16.mxu0 0
    %741 = vmatpush1.bf16.msra.mxu0 %v723
    %742 = vmatprep.subr.bf16.mxu0 0
    %743 = vmatpush1.bf16.msra.mxu0 %v722
    %744 = vmatprep.subr.bf16.mxu0 0
    %745 = vmatpush1.bf16.msra.mxu0 %v721
    %746 = vmatprep.subr.bf16.mxu0 0
    %747 = vmatpush1.bf16.msra.mxu0 %v720
    %748 = vmatprep.subr.bf16.mxu0 0
    %749 = vmatpush2.bf16.msra.mxu0 0
    %750 = vmatprep.subr.bf16.mxu0 0
    %751 = vmatpush2.bf16.msra.mxu0 0
    %752 = vmatprep.subr.bf16.mxu0 0
    %753 = vmatpush2.bf16.msra.mxu0 0
    %754 = vmatprep.subr.bf16.mxu0 0
    %755 = vmatpush2.bf16.msra.mxu0 0
    %756 = vmatprep.subr.bf16.mxu0 0
    %757 = vmatpush2.bf16.msra.mxu0 0
    %758 = vmatprep.subr.bf16.mxu0 0
    %759 = vmatpush2.bf16.msra.mxu0 0
    %760 = vmatprep.subr.bf16.mxu0 0
    %761 = vmatpush2.bf16.msra.mxu0 0
    %762 = vmatprep.subr.bf16.mxu0 0
    %763 = vmatpush2.bf16.msra.mxu0 0
    %764 = vmatprep.mubr.bf16.mxu0 0
    %765 = vmatmul.mubr.bf16.gmra.mxu0 %v730
    %v766 = vpop.f32.mrf.mxu0
    %v767 = vadd.f32 %v703, %v766
    %v768 = vpop.f32.mrf.mxu0
    %v769 = vpop.f32.mrf.mxu0
    %v770 = vadd.f32 %v703, %v769
    %v771 = vpop.f32.mrf.mxu0
    %772 = vdwg.mxu0
    %v773 = vadd.f32 %v767, %v634
    %v774 = vadd.f32 %v770, %v635
    %v775 = vsel %vm81, %v773, 0.0
    %776 = vadd.xlane.f32.xlu0 %v775
    %v777 = vpop.xlane.xlu0 %776
    %v778 = vsel %vm81, %v774, 0.0
    %779 = vadd.xlane.f32.xlu0 %v778
    %v780 = vpop.xlane.xlu0 %779
    %v781 = vmul.f32 %v777, %v603
    %v782 = vmul.f32 %v780, %v603
    %v783 = vsub.f32 %v773, %v781
    %v784 = vsub.f32 %v774, %v782
    %v785 = vmul.f32 %v783, %v783
    %v786 = vmul.f32 %v784, %v784
    %v787 = vsel %vm81, %v785, 0.0
    %788 = vadd.xlane.f32.xlu0 %v787
    %v789 = vpop.xlane.xlu0 %788
    %v790 = vsel %vm81, %v786, 0.0
    %791 = vadd.xlane.f32.xlu0 %v790
    %v792 = vpop.xlane.xlu0 %791
    %v793 = vmul.f32 %v789, %v603
    %v794 = vmul.f32 %v792, %v603
    %v795 = vadd.f32 %v793, 1e-05
    %v796 = vadd.f32 %v794, 1e-05
    %v797 = vrsqrt.pop %v795
    %v798 = vrsqrt.pop %v796
    %v799 = vmul.f32 %v783, %v797
    %v800 = vmul.f32 %v784, %v798
    %v801 = vlaneseq
    %v802 = vshrl.u32 %v801, 7
    %v803 = vsub.s32 0, %v802
    %v804 = vrot.slane %v539, %v803
    %v805 = vmul.f32 %v799, %v804
    %v806 = vmul.f32 %v800, %v804
    %v807 = vlaneseq
    %v808 = vshrl.u32 %v807, 7
    %v809 = vsub.s32 0, %v808
    %v810 = vrot.slane %v540, %v809
    %v811 = vadd.f32 %v805, %v810
    %v812 = vadd.f32 %v806, %v810
    %813 = vst.msk [vmem:[#allocation2] sm:$0xff] %vm81, %v811
    %814 = vst.msk [vmem:[#allocation2 + $0x8] sm:$0xff] %vm81, %v812
    // Predicated region
    $region22: #{tpu_custom_call.1} parent=1 // pred_check
      _
    $region23: #{tpu_custom_call.1} parent=1 // pred_check_branch
      %816 = sbr.rel (0) target = $region25
    $region24: #{tpu_custom_call.1} parent=1 // pred_region
      %s818 = ssub.s32 256, 256
      %819 = vsyncadd [#allocation3], %s818
      %s820 = sshll.u32 [#allocation2], 4
      %s821 = int_to_ptr.vmem [resolvable:$true] %s820
      %826 = dma.vmem_to_hbm [thread:$0]  %s821, 256, %s5, [#allocation3], 128, 128, 8
    $region25: #{tpu_custom_call.1} parent=1 // pred_fallthru
      _
    // Predicated region
    $region26: #{tpu_custom_call.1} parent=1 // pred_check
      _
    $region27: #{tpu_custom_call.1} parent=1 // pred_check_branch
      %828 = sbr.rel (0) target = $region29
    $region28: #{tpu_custom_call.1} parent=1 // pred_region
      %829 = dma.done [#allocation3], 256
    $region29: #{tpu_custom_call.1} parent=1 // pred_fallthru
      _
    %830 = vsyncpa [#allocation3], 1

</llo_original>
